<compile_context>
chip_gen: v5e
topology: v5e:2x2
jax: 0.10.0
libtpu: 0.0.40
codegen_flags: <defaults>
</compile_context>

<pallas_src>
import functools

import jax
import jax.numpy as jnp
from jax import lax
from jax.experimental import pallas as pl
from jax.experimental.pallas import tpu as pltpu
import numpy as np


def _round_up(x, m):
    return ((x + m - 1) // m) * m


def _pick_batch_tile(B):
    """Largest multiple-of-8 divisor of round_up(B, 8) that is <= 256 (no padding waste);
    split in half only when that would be a single >=256-row tile, so the 'parallel'
    batch axis can shard across both v7x TensorCores."""
    B8 = _round_up(max(B, 1), 8)
    bt, d = 8, 8
    while d <= min(B8, 256):
        if B8 % d == 0:
            bt = d
        d += 8
    if bt == B8 and B8 >= 256:
        bt = B8 // 2
    return bt, B8


def _pick_time_chunk(T, batch_tile, H2p, budget_bytes=4 << 20):
    """Largest divisor of T whose (tc, batch_tile, H2p) f32 tile fits ~budget_bytes,
    keeping VMEM use independent of T for long sequences."""
    per_step = batch_tile * H2p * 4
    max_tc = max(1, budget_bytes // per_step)
    tc = 1
    for d in range(1, T + 1):
        if T % d == 0 and d <= max_tc:
            tc = d
    return tc


def _birnn_recurrence_kernel(u_ref,    # (tc, BT, H2p)  u[i] = [u_fwd(t0+i) | u_bwd(T-1-(t0+i))], bias folded
                             whh_ref,  # (H2p, H2p)     blockdiag(Whh_f^T, Whh_b^T), zero-padded lanes
                             out_ref,  # (tc, BT, H2p)  out[i] = [h_fwd(t0+i) | h_bwd(T-1-(t0+i))]
                             h_ref,    # scratch (BT, H2p) fused hidden state, persists across time chunks
                             *, unroll):
    # h_0 = 0 for both directions (PyTorch default) at the first time chunk.
    @pl.when(pl.program_id(1) == 0)
    def _():
        h_ref[...] = jnp.zeros_like(h_ref)

    tc = u_ref.shape[0]
    w = whh_ref[...]  # hoisted: loaded once per grid step

    def step(i, h):
        # One fused MXU push per timestep; block-diagonal W_hh keeps the two directions
        # exactly independent. Hidden state is carried in vregs (fori_loop carry).
        h_new = jnp.tanh(
            u_ref[i].astype(jnp.float32)
            + jnp.dot(h.astype(w.dtype), w, preferred_element_type=jnp.float32)
        )
        out_ref[i] = h_new          # single dense, lane-aligned (128-wide) store
        return h_new

    # Bounded unroll: keeps LLO scheduler visibility without vreg spills for big tiles.
    h_ref[...] = lax.fori_loop(0, tc, step, h_ref[...], unroll=unroll)


def question_model_forward(x, params, *, batch_tile=None, compute_dtype=jnp.float32):
    """x: (B, T, n_input) float32 -> (B, T, 2*n_hidden) float32."""
    B, T, D = x.shape
    H = params["w_ih_f"].shape[0]
    H2 = 2 * H
    H2p = _round_up(H2, 128)          # lane-pad the packed [fwd|bwd] feature dim
    f32 = jnp.float32
    prec = lax.Precision.HIGHEST if compute_dtype == jnp.float32 else lax.Precision.DEFAULT

    # ---- batch tiling --------------------------------------------------------------
    if batch_tile is None:
        batch_tile, B_pad = _pick_batch_tile(B)
    else:
        batch_tile = _round_up(batch_tile, 8)
        B_pad = _round_up(B, batch_tile)
    n_tiles = B_pad // batch_tile

    xp = x if B_pad == B else jnp.pad(x, ((0, B_pad - B), (0, 0), (0, 0)))

    # ---- (1)+(2) hoisted time-major input projection, backward half pre-flipped -----
    u_f = (jnp.einsum("btd,dh->tbh", xp, params["w_ih_f"].T, precision=prec)
           + (params["b_ih_f"] + params["b_hh_f"]))                       # (T, B_pad, H)
    u_b = (jnp.einsum("btd,dh->tbh", xp[:, ::-1, :], params["w_ih_b"].T, precision=prec)
           + (params["b_ih_b"] + params["b_hh_b"]))                       # (T, B_pad, H), time-flipped
    u = jnp.concatenate([u_f, u_b], axis=-1)                              # (T, B_pad, 2H)
    if H2p != H2:
        u = jnp.pad(u, ((0, 0), (0, 0), (0, H2p - H2)))                   # exact-zero pad lanes
    u = u.astype(compute_dtype)

    # ---- (3) fused block-diagonal recurrent weight, padded rows/cols exactly zero ---
    whh_bd = jnp.zeros((H2p, H2p), f32)
    whh_bd = whh_bd.at[:H, :H].set(params["w_hh_f"].T)
    whh_bd = whh_bd.at[H:H2, H:H2].set(params["w_hh_b"].T)
    whh_bd = whh_bd.astype(compute_dtype)

    # ---- (4) time chunking + contiguous per-tile HBM slabs ---------------------------
    tc = _pick_time_chunk(T, batch_tile, H2p)
    n_chunks = T // tc
    # (n_tiles, T, batch_tile, H2p): each (b, t_chunk) block is one contiguous HBM slab.
    u4 = u.reshape(T, n_tiles, batch_tile, H2p).transpose(1, 0, 2, 3)

    # ---- (5) VMEM budget from the actual double-buffered tiles (no 2x hedge) ---------
    itemsize = jnp.dtype(compute_dtype).itemsize
    in_tile = tc * batch_tile * H2p * itemsize
    out_tile = tc * batch_tile * H2p * 4
    need = 2 * in_tile + 2 * out_tile + 2 * H2p * H2p * itemsize + batch_tile * H2p * 4
    vmem_limit = int(min(max(need + (2 << 20), 16 << 20), 48 << 20))

    unroll = min(tc, 4 if batch_tile >= 128 else 8)

    out4 = pl.pallas_call(
        functools.partial(_birnn_recurrence_kernel, unroll=unroll),
        out_shape=jax.ShapeDtypeStruct((n_tiles, T, batch_tile, H2p), f32),
        grid=(n_tiles, n_chunks),
        in_specs=[
            pl.BlockSpec((None, tc, batch_tile, H2p), lambda b, t: (b, t, 0, 0)),
            pl.BlockSpec((H2p, H2p), lambda b, t: (0, 0)),
        ],
        out_specs=pl.BlockSpec((None, tc, batch_tile, H2p), lambda b, t: (b, t, 0, 0)),
        scratch_shapes=[pltpu.VMEM((batch_tile, H2p), f32)],
        compiler_params=pltpu.CompilerParams(
            # batch tiles independent -> shard across v7x's two TensorCores;
            # time chunks carry the hidden state -> "arbitrary" (sequential).
            dimension_semantics=("parallel", "arbitrary"),
            vmem_limit_bytes=vmem_limit,
        ),
    )(u4, whh_bd)

    # ---- (6) dense kernel output: un-flip the backward half, strip padding ----------
    out_t = out4.transpose(1, 0, 2, 3).reshape(T, B_pad, H2p)
    fwd = out_t[:, :B, :H]          # forward hidden, already time-aligned
    bwd = out_t[::-1, :B, H:H2]     # step i held backward hidden for time T-1-i -> flip
    return jnp.concatenate([fwd, bwd], axis=-1).transpose(1, 0, 2)   # (B, T, 2H)


def init_params(key, n_input, n_hidden):
    """Deterministic PyTorch-style init: U(-1/sqrt(H), 1/sqrt(H))."""
    k = 1.0 / np.sqrt(n_hidden)
    keys = jax.random.split(key, 8)
    u = lambda kk, shape: jax.random.uniform(kk, shape, jnp.float32, -k, k)
    return {
        "w_ih_f": u(keys[0], (n_hidden, n_input)),
        "w_hh_f": u(keys[1], (n_hidden, n_hidden)),
        "b_ih_f": u(keys[2], (n_hidden,)),
        "b_hh_f": u(keys[3], (n_hidden,)),
        "w_ih_b": u(keys[4], (n_hidden, n_input)),
        "w_hh_b": u(keys[5], (n_hidden, n_hidden)),
        "b_ih_b": u(keys[6], (n_hidden,)),
        "b_hh_b": u(keys[7], (n_hidden,)),
    }


def _reference_birnn(x, params):
    """Pure-JAX reference matching torch.nn.RNN(batch_first=True, bidirectional=True)."""
    B, T, D = x.shape
    H = params["w_ih_f"].shape[0]
    hp = lax.Precision.HIGHEST

    def direction(xs, w_ih, w_hh, b_ih, b_hh):
        def step(h, x_t):
            h_new = jnp.tanh(jnp.dot(x_t, w_ih.T, precision=hp) + b_ih
                             + jnp.dot(h, w_hh.T, precision=hp) + b_hh)
            return h_new, h_new
        h0 = jnp.zeros((B, H), jnp.float32)
        _, hs = lax.scan(step, h0, jnp.transpose(xs, (1, 0, 2)))
        return jnp.transpose(hs, (1, 0, 2))  # (B, T, H)

    fwd = direction(x, params["w_ih_f"], params["w_hh_f"], params["b_ih_f"], params["b_hh_f"])
    bwd = direction(x[:, ::-1, :], params["w_ih_b"], params["w_hh_b"],
                    params["b_ih_b"], params["b_hh_b"])[:, ::-1, :]
    return jnp.concatenate([fwd, bwd], axis=-1)


if __name__ == "__main__":
    B, T, n_input, n_hidden = 2, 8, 16, 32

    key = jax.random.PRNGKey(0)
    k_x, k_p = jax.random.split(key)
    x = jax.random.normal(k_x, (B, T, n_input), jnp.float32)
    params = init_params(k_p, n_input, n_hidden)

    out = question_model_forward(x, params)
    out = jax.block_until_ready(out)

    ref = jax.block_until_ready(_reference_birnn(x, params))
    assert out.shape == (B, T, 2 * n_hidden), out.shape
    np.testing.assert_allclose(np.asarray(out), np.asarray(ref), rtol=1e-4, atol=1e-4)

    print("KERNEL_OK")
</pallas_src>

<mosaic_0001>
module attributes {stable_mosaic.version = 11 : i64} {
  func.func @_birnn_recurrence_kernel(%arg0: i32, %arg1: i32, %arg2: memref<1x8x8x128xf32, #tpu.memory_space<vmem>>, %arg3: memref<128x128xf32, #tpu.memory_space<vmem>>, %arg4: memref<1x8x8x128xf32, #tpu.memory_space<vmem>>, %arg5: memref<8x128xf32, #tpu.memory_space<vmem>>) attributes {dimension_semantics = [#tpu.dimension_semantics<parallel>, #tpu.dimension_semantics<arbitrary>], iteration_bounds = array<i64: 1, 1>, scalar_prefetch = 0 : i64, scratch_operands = 1 : i64, tpu.core_type = #tpu.core_type<tc>, window_params = [{transform_indices = @transform_0, window_bounds = array<i64: 1, 8, 8, 128>}, {pipeline_mode = #tpu.pipeline_mode<synchronous>, transform_indices = @transform_1, window_bounds = array<i64: 128, 128>}, {transform_indices = @transform_2, window_bounds = array<i64: 1, 8, 8, 128>}]} {
    %c0_i32 = arith.constant 0 : i32
    %0 = arith.cmpi eq, %arg1, %c0_i32 : i32
    %1 = arith.extui %0 : i1 to i32
    %c0_i32_0 = arith.constant 0 : i32
    %2 = arith.cmpi ne, %1, %c0_i32_0 : i32
    scf.if %2 {
      %cst_62 = arith.constant 0.000000e+00 : f32
      %86 = vector.broadcast %cst_62 : f32 to vector<8x128xf32>
      %c0_63 = arith.constant 0 : index
      %c0_64 = arith.constant 0 : index
      %87 = vector.load %arg5[%c0_63, %c0_64] : memref<8x128xf32, #tpu.memory_space<vmem>>, vector<8x128xf32>
      tpu.vector_store %arg5[%c0_63, %c0_64], %86 {strides = array<i32>} : memref<8x128xf32, #tpu.memory_space<vmem>>, vector<8x128xf32>,
    } else {
    }
    %c0 = arith.constant 0 : index
    %c0_1 = arith.constant 0 : index
    %3 = vector.load %arg3[%c0, %c0_1] : memref<128x128xf32, #tpu.memory_space<vmem>>, vector<128x128xf32>
    %c0_2 = arith.constant 0 : index
    %c0_3 = arith.constant 0 : index
    %4 = vector.load %arg5[%c0_2, %c0_3] : memref<8x128xf32, #tpu.memory_space<vmem>>, vector<8x128xf32>
    %c0_i32_4 = arith.constant 0 : i32
    %c0_5 = arith.constant 0 : index
    %5 = arith.index_cast %c0_i32_4 : i32 to index
    %c0_6 = arith.constant 0 : index
    %c0_7 = arith.constant 0 : index
    %6 = vector.load %arg2[%c0_5, %5, %c0_6, %c0_7] : memref<1x8x8x128xf32, #tpu.memory_space<vmem>>, vector<1x1x8x128xf32>
    %7 = vector.shape_cast %6 : vector<1x1x8x128xf32> to vector<8x128xf32>
    %cst = arith.constant dense<0.000000e+00> : vector<8x128xf32>
    %8 = tpu.matmul %4, %3, %cst {dimension_numbers = #tpu.dot_dimension_numbers<[1], [0], [0], [1], [0, 0, 1, 1], [], []>} : vector<8x128xf32>, vector<128x128xf32>, vector<8x128xf32> -> vector<8x128xf32>
    %9 = arith.addf %7, %8 : vector<8x128xf32>
    %10 = math.tanh %9 : vector<8x128xf32>
    %c0_8 = arith.constant 0 : index
    %11 = arith.index_cast %c0_i32_4 : i32 to index
    %c0_9 = arith.constant 0 : index
    %c0_10 = arith.constant 0 : index
    %12 = vector.load %arg4[%c0_8, %11, %c0_9, %c0_10] : memref<1x8x8x128xf32, #tpu.memory_space<vmem>>, vector<1x1x8x128xf32>
    %13 = vector.shape_cast %12 : vector<1x1x8x128xf32> to vector<8x128xf32>
    %14 = vector.shape_cast %10 : vector<8x128xf32> to vector<1x1x8x128xf32>
    tpu.vector_store %arg4[%c0_8, %11, %c0_9, %c0_10], %14 {strides = array<i32>} : memref<1x8x8x128xf32, #tpu.memory_space<vmem>>, vector<1x1x8x128xf32>,
    %c1_i32 = arith.constant 1 : i32
    %c0_11 = arith.constant 0 : index
    %15 = arith.index_cast %c1_i32 : i32 to index
    %c0_12 = arith.constant 0 : index
    %c0_13 = arith.constant 0 : index
    %16 = vector.load %arg2[%c0_11, %15, %c0_12, %c0_13] : memref<1x8x8x128xf32, #tpu.memory_space<vmem>>, vector<1x1x8x128xf32>
    %17 = vector.shape_cast %16 : vector<1x1x8x128xf32> to vector<8x128xf32>
    %cst_14 = arith.constant dense<0.000000e+00> : vector<8x128xf32>
    %18 = tpu.matmul %10, %3, %cst_14 {dimension_numbers = #tpu.dot_dimension_numbers<[1], [0], [0], [1], [0, 0, 1, 1], [], []>} : vector<8x128xf32>, vector<128x128xf32>, vector<8x128xf32> -> vector<8x128xf32>
    %19 = arith.addf %17, %18 : vector<8x128xf32>
    %20 = math.tanh %19 : vector<8x128xf32>
    %c0_15 = arith.constant 0 : index
    %21 = arith.index_cast %c1_i32 : i32 to index
    %c0_16 = arith.constant 0 : index
    %c0_17 = arith.constant 0 : index
    %22 = vector.load %arg4[%c0_15, %21, %c0_16, %c0_17] : memref<1x8x8x128xf32, #tpu.memory_space<vmem>>, vector<1x1x8x128xf32>
    %23 = vector.shape_cast %22 : vector<1x1x8x128xf32> to vector<8x128xf32>
    %24 = vector.shape_cast %20 : vector<8x128xf32> to vector<1x1x8x128xf32>
    tpu.vector_store %arg4[%c0_15, %21, %c0_16, %c0_17], %24 {strides = array<i32>} : memref<1x8x8x128xf32, #tpu.memory_space<vmem>>, vector<1x1x8x128xf32>,
    %c2_i32 = arith.constant 2 : i32
    %c0_18 = arith.constant 0 : index
    %25 = arith.index_cast %c2_i32 : i32 to index
    %c0_19 = arith.constant 0 : index
    %c0_20 = arith.constant 0 : index
    %26 = vector.load %arg2[%c0_18, %25, %c0_19, %c0_20] : memref<1x8x8x128xf32, #tpu.memory_space<vmem>>, vector<1x1x8x128xf32>
    %27 = vector.shape_cast %26 : vector<1x1x8x128xf32> to vector<8x128xf32>
    %cst_21 = arith.constant dense<0.000000e+00> : vector<8x128xf32>
    %28 = tpu.matmul %20, %3, %cst_21 {dimension_numbers = #tpu.dot_dimension_numbers<[1], [0], [0], [1], [0, 0, 1, 1], [], []>} : vector<8x128xf32>, vector<128x128xf32>, vector<8x128xf32> -> vector<8x128xf32>
    %29 = arith.addf %27, %28 : vector<8x128xf32>
    %30 = math.tanh %29 : vector<8x128xf32>
    %c0_22 = arith.constant 0 : index
    %31 = arith.index_cast %c2_i32 : i32 to index
    %c0_23 = arith.constant 0 : index
    %c0_24 = arith.constant 0 : index
    %32 = vector.load %arg4[%c0_22, %31, %c0_23, %c0_24] : memref<1x8x8x128xf32, #tpu.memory_space<vmem>>, vector<1x1x8x128xf32>
    %33 = vector.shape_cast %32 : vector<1x1x8x128xf32> to vector<8x128xf32>
    %34 = vector.shape_cast %30 : vector<8x128xf32> to vector<1x1x8x128xf32>
    tpu.vector_store %arg4[%c0_22, %31, %c0_23, %c0_24], %34 {strides = array<i32>} : memref<1x8x8x128xf32, #tpu.memory_space<vmem>>, vector<1x1x8x128xf32>,
    %c3_i32 = arith.constant 3 : i32
    %c0_25 = arith.constant 0 : index
    %35 = arith.index_cast %c3_i32 : i32 to index
    %c0_26 = arith.constant 0 : index
    %c0_27 = arith.constant 0 : index
    %36 = vector.load %arg2[%c0_25, %35, %c0_26, %c0_27] : memref<1x8x8x128xf32, #tpu.memory_space<vmem>>, vector<1x1x8x128xf32>
    %37 = vector.shape_cast %36 : vector<1x1x8x128xf32> to vector<8x128xf32>
    %cst_28 = arith.constant dense<0.000000e+00> : vector<8x128xf32>
    %38 = tpu.matmul %30, %3, %cst_28 {dimension_numbers = #tpu.dot_dimension_numbers<[1], [0], [0], [1], [0, 0, 1, 1], [], []>} : vector<8x128xf32>, vector<128x128xf32>, vector<8x128xf32> -> vector<8x128xf32>
    %39 = arith.addf %37, %38 : vector<8x128xf32>
    %40 = math.tanh %39 : vector<8x128xf32>
    %c0_29 = arith.constant 0 : index
    %41 = arith.index_cast %c3_i32 : i32 to index
    %c0_30 = arith.constant 0 : index
    %c0_31 = arith.constant 0 : index
    %42 = vector.load %arg4[%c0_29, %41, %c0_30, %c0_31] : memref<1x8x8x128xf32, #tpu.memory_space<vmem>>, vector<1x1x8x128xf32>
    %43 = vector.shape_cast %42 : vector<1x1x8x128xf32> to vector<8x128xf32>
    %44 = vector.shape_cast %40 : vector<8x128xf32> to vector<1x1x8x128xf32>
    tpu.vector_store %arg4[%c0_29, %41, %c0_30, %c0_31], %44 {strides = array<i32>} : memref<1x8x8x128xf32, #tpu.memory_space<vmem>>, vector<1x1x8x128xf32>,
    %c4_i32 = arith.constant 4 : i32
    %c0_32 = arith.constant 0 : index
    %45 = arith.index_cast %c4_i32 : i32 to index
    %c0_33 = arith.constant 0 : index
    %c0_34 = arith.constant 0 : index
    %46 = vector.load %arg2[%c0_32, %45, %c0_33, %c0_34] : memref<1x8x8x128xf32, #tpu.memory_space<vmem>>, vector<1x1x8x128xf32>
    %47 = vector.shape_cast %46 : vector<1x1x8x128xf32> to vector<8x128xf32>
    %cst_35 = arith.constant dense<0.000000e+00> : vector<8x128xf32>
    %48 = tpu.matmul %40, %3, %cst_35 {dimension_numbers = #tpu.dot_dimension_numbers<[1], [0], [0], [1], [0, 0, 1, 1], [], []>} : vector<8x128xf32>, vector<128x128xf32>, vector<8x128xf32> -> vector<8x128xf32>
    %49 = arith.addf %47, %48 : vector<8x128xf32>
    %50 = math.tanh %49 : vector<8x128xf32>
    %c0_36 = arith.constant 0 : index
    %51 = arith.index_cast %c4_i32 : i32 to index
    %c0_37 = arith.constant 0 : index
    %c0_38 = arith.constant 0 : index
    %52 = vector.load %arg4[%c0_36, %51, %c0_37, %c0_38] : memref<1x8x8x128xf32, #tpu.memory_space<vmem>>, vector<1x1x8x128xf32>
    %53 = vector.shape_cast %52 : vector<1x1x8x128xf32> to vector<8x128xf32>
    %54 = vector.shape_cast %50 : vector<8x128xf32> to vector<1x1x8x128xf32>
    tpu.vector_store %arg4[%c0_36, %51, %c0_37, %c0_38], %54 {strides = array<i32>} : memref<1x8x8x128xf32, #tpu.memory_space<vmem>>, vector<1x1x8x128xf32>,
    %c5_i32 = arith.constant 5 : i32
    %c0_39 = arith.constant 0 : index
    %55 = arith.index_cast %c5_i32 : i32 to index
    %c0_40 = arith.constant 0 : index
    %c0_41 = arith.constant 0 : index
    %56 = vector.load %arg2[%c0_39, %55, %c0_40, %c0_41] : memref<1x8x8x128xf32, #tpu.memory_space<vmem>>, vector<1x1x8x128xf32>
    %57 = vector.shape_cast %56 : vector<1x1x8x128xf32> to vector<8x128xf32>
    %cst_42 = arith.constant dense<0.000000e+00> : vector<8x128xf32>
    %58 = tpu.matmul %50, %3, %cst_42 {dimension_numbers = #tpu.dot_dimension_numbers<[1], [0], [0], [1], [0, 0, 1, 1], [], []>} : vector<8x128xf32>, vector<128x128xf32>, vector<8x128xf32> -> vector<8x128xf32>
    %59 = arith.addf %57, %58 : vector<8x128xf32>
    %60 = math.tanh %59 : vector<8x128xf32>
    %c0_43 = arith.constant 0 : index
    %61 = arith.index_cast %c5_i32 : i32 to index
    %c0_44 = arith.constant 0 : index
    %c0_45 = arith.constant 0 : index
    %62 = vector.load %arg4[%c0_43, %61, %c0_44, %c0_45] : memref<1x8x8x128xf32, #tpu.memory_space<vmem>>, vector<1x1x8x128xf32>
    %63 = vector.shape_cast %62 : vector<1x1x8x128xf32> to vector<8x128xf32>
    %64 = vector.shape_cast %60 : vector<8x128xf32> to vector<1x1x8x128xf32>
    tpu.vector_store %arg4[%c0_43, %61, %c0_44, %c0_45], %64 {strides = array<i32>} : memref<1x8x8x128xf32, #tpu.memory_space<vmem>>, vector<1x1x8x128xf32>,
    %c6_i32 = arith.constant 6 : i32
    %c0_46 = arith.constant 0 : index
    %65 = arith.index_cast %c6_i32 : i32 to index
    %c0_47 = arith.constant 0 : index
    %c0_48 = arith.constant 0 : index
    %66 = vector.load %arg2[%c0_46, %65, %c0_47, %c0_48] : memref<1x8x8x128xf32, #tpu.memory_space<vmem>>, vector<1x1x8x128xf32>
    %67 = vector.shape_cast %66 : vector<1x1x8x128xf32> to vector<8x128xf32>
    %cst_49 = arith.constant dense<0.000000e+00> : vector<8x128xf32>
    %68 = tpu.matmul %60, %3, %cst_49 {dimension_numbers = #tpu.dot_dimension_numbers<[1], [0], [0], [1], [0, 0, 1, 1], [], []>} : vector<8x128xf32>, vector<128x128xf32>, vector<8x128xf32> -> vector<8x128xf32>
    %69 = arith.addf %67, %68 : vector<8x128xf32>
    %70 = math.tanh %69 : vector<8x128xf32>
    %c0_50 = arith.constant 0 : index
    %71 = arith.index_cast %c6_i32 : i32 to index
    %c0_51 = arith.constant 0 : index
    %c0_52 = arith.constant 0 : index
    %72 = vector.load %arg4[%c0_50, %71, %c0_51, %c0_52] : memref<1x8x8x128xf32, #tpu.memory_space<vmem>>, vector<1x1x8x128xf32>
    %73 = vector.shape_cast %72 : vector<1x1x8x128xf32> to vector<8x128xf32>
    %74 = vector.shape_cast %70 : vector<8x128xf32> to vector<1x1x8x128xf32>
    tpu.vector_store %arg4[%c0_50, %71, %c0_51, %c0_52], %74 {strides = array<i32>} : memref<1x8x8x128xf32, #tpu.memory_space<vmem>>, vector<1x1x8x128xf32>,
    %c7_i32 = arith.constant 7 : i32
    %c0_53 = arith.constant 0 : index
    %75 = arith.index_cast %c7_i32 : i32 to index
    %c0_54 = arith.constant 0 : index
    %c0_55 = arith.constant 0 : index
    %76 = vector.load %arg2[%c0_53, %75, %c0_54, %c0_55] : memref<1x8x8x128xf32, #tpu.memory_space<vmem>>, vector<1x1x8x128xf32>
    %77 = vector.shape_cast %76 : vector<1x1x8x128xf32> to vector<8x128xf32>
    %cst_56 = arith.constant dense<0.000000e+00> : vector<8x128xf32>
    %78 = tpu.matmul %70, %3, %cst_56 {dimension_numbers = #tpu.dot_dimension_numbers<[1], [0], [0], [1], [0, 0, 1, 1], [], []>} : vector<8x128xf32>, vector<128x128xf32>, vector<8x128xf32> -> vector<8x128xf32>
    %79 = arith.addf %77, %78 : vector<8x128xf32>
    %80 = math.tanh %79 : vector<8x128xf32>
    %c0_57 = arith.constant 0 : index
    %81 = arith.index_cast %c7_i32 : i32 to index
    %c0_58 = arith.constant 0 : index
    %c0_59 = arith.constant 0 : index
    %82 = vector.load %arg4[%c0_57, %81, %c0_58, %c0_59] : memref<1x8x8x128xf32, #tpu.memory_space<vmem>>, vector<1x1x8x128xf32>
    %83 = vector.shape_cast %82 : vector<1x1x8x128xf32> to vector<8x128xf32>
    %84 = vector.shape_cast %80 : vector<8x128xf32> to vector<1x1x8x128xf32>
    tpu.vector_store %arg4[%c0_57, %81, %c0_58, %c0_59], %84 {strides = array<i32>} : memref<1x8x8x128xf32, #tpu.memory_space<vmem>>, vector<1x1x8x128xf32>,
    %c8_i32 = arith.constant 8 : i32
    %c0_60 = arith.constant 0 : index
    %c0_61 = arith.constant 0 : index
    %85 = vector.load %arg5[%c0_60, %c0_61] : memref<8x128xf32, #tpu.memory_space<vmem>>, vector<8x128xf32>
    tpu.vector_store %arg5[%c0_60, %c0_61], %80 {strides = array<i32>} : memref<8x128xf32, #tpu.memory_space<vmem>>, vector<8x128xf32>,
    return
  }
  func.func @transform_0(%arg0: i32, %arg1: i32) -> (i32, i32, i32, i32) {
    %c0_i32 = arith.constant 0 : i32
    %c0_i32_0 = arith.constant 0 : i32
    %c0_i32_1 = arith.constant 0 : i32
    return %arg0, %arg1, %c0_i32, %c0_i32_0 : i32, i32, i32, i32
  }
  func.func @transform_1(%arg0: i32, %arg1: i32) -> (i32, i32) {
    %c0_i32 = arith.constant 0 : i32
    %c0_i32_0 = arith.constant 0 : i32
    %c0_i32_1 = arith.constant 0 : i32
    return %c0_i32, %c0_i32_0 : i32, i32
  }
  func.func @transform_2(%arg0: i32, %arg1: i32) -> (i32, i32, i32, i32) {
    %c0_i32 = arith.constant 0 : i32
    %c0_i32_0 = arith.constant 0 : i32
    %c0_i32_1 = arith.constant 0 : i32
    return %arg0, %arg1, %c0_i32, %c0_i32_0 : i32, i32, i32, i32
  }
}

</mosaic_0001>

<llo_original>
// kernel: tpu_custom_call.1
$region0: #{tpu_custom_call.1}
  #allocation0 [shape = 'u32[]', space=smem, size = 0x4, offset = 0x4, fixed_abs, tag = 'smem constant byte address 0x4 - core index']
  #allocation1 [shape = 'u32[72,128]{1,0:T(1,128)}', space=vmem, size = 0x9000, scoped, tag = 'internal scratch']
  #allocation2 [shape = 'f32[8,128]{1,0:T(8,128)}', space=vmem, size = 0x1000, scoped, tag = 'scratch operand']
  %s0 = inlined_call_operand.hbm [shape: f32[1,8,8,128], index: 0, kind: input, shape index: {}]
  %s1 = inlined_call_operand.hbm [shape: f32[128,128], index: 1, kind: input, shape index: {}]
  %s2 = inlined_call_operand.hbm [shape: f32[1,8,8,128], index: 2, kind: output, shape index: {}]
  %s3 = sld [smem:[#allocation0]]
  $region30: #{tpu_custom_call.1} parent=0
    _
  %s5 = ssub.s32 1, %s3
  %s6 = scalar_select 0, %s5, %s3
  $region1: #{tpu_custom_call.1} parent=0
    #allocation3 [shape = 'u8[32768]{0}', space=vmem, size = 0x8000, scoped, tag = 'input window, operand 0, single buffered']
    #allocation4 [shape = 's32[1]{0}', space=sflag, size = 0x4, scoped, tag = 'scoped memory for tpu_custom_call.1']
    #allocation5 [shape = 's32[1]{0}', space=sflag, size = 0x4, scoped, tag = 'scoped memory for tpu_custom_call.1']
    #allocation6 [shape = 'u8[65536]{0}', space=vmem, size = 0x10000, scoped, tag = 'input window, operand 1, single buffered']
    #allocation7 [shape = 's32[1]{0}', space=sflag, size = 0x4, scoped, tag = 'scoped memory for tpu_custom_call.1']
    #allocation8 [shape = 'u8[32768]{0}', space=vmem, size = 0x8000, scoped, tag = 'output window, operand 0, single buffered']
    %7 = vsyncpa [#allocation4], 0
    %8 = vsyncpa [#allocation7], 0
    %9 = vsyncpa [#allocation5], 0
    // Predicated region
    $region2: #{tpu_custom_call.1} parent=1 // pred_check
      _
    $region3: #{tpu_custom_call.1} parent=1 // pred_check_branch
      %11 = sbr.rel (0) target = $region5
    $region4: #{tpu_custom_call.1} parent=1 // pred_region
      %13 = vsyncadd [#allocation4], 0
      %s14 = sshll.u32 %s0, 4
      %s15 = int_to_ptr.hbm [resolvable:$true] %s14
      %s16 = sshll.u32 [#allocation3], 4
      %s17 = int_to_ptr.vmem [resolvable:$true] %s16
      %22 = dma.hbm_to_vmem [thread:$0]  %s15, 1024, %s17, [#allocation4], 128, 128, 8
    $region5: #{tpu_custom_call.1} parent=1 // pred_fallthru
      _
    // Predicated region
    $region6: #{tpu_custom_call.1} parent=1 // pred_check
      _
    $region7: #{tpu_custom_call.1} parent=1 // pred_check_branch
      %24 = sbr.rel (0) target = $region9
    $region8: #{tpu_custom_call.1} parent=1 // pred_region
      %26 = vsyncadd [#allocation7], 0
      %s27 = sshll.u32 %s1, 4
      %s28 = int_to_ptr.hbm [resolvable:$true] %s27
      %s29 = sshll.u32 [#allocation6], 4
      %s30 = int_to_ptr.vmem [resolvable:$true] %s29
      %35 = dma.hbm_to_vmem [thread:$0]  %s28, 2048, %s30, [#allocation7], 128, 128, 8
    $region9: #{tpu_custom_call.1} parent=1 // pred_fallthru
      _
    // Predicated region
    $region10: #{tpu_custom_call.1} parent=1 // pred_check
      _
    $region11: #{tpu_custom_call.1} parent=1 // pred_check_branch
      %37 = sbr.rel (0) target = $region13
    $region12: #{tpu_custom_call.1} parent=1 // pred_region
      %39 = dma.done [#allocation4], 1024
    $region13: #{tpu_custom_call.1} parent=1 // pred_fallthru
      _
    // Predicated region
    $region14: #{tpu_custom_call.1} parent=1 // pred_check
      _
    $region15: #{tpu_custom_call.1} parent=1 // pred_check_branch
      %41 = sbr.rel (0) target = $region17
    $region16: #{tpu_custom_call.1} parent=1 // pred_region
      %43 = dma.done [#allocation7], 2048
    $region17: #{tpu_custom_call.1} parent=1 // pred_fallthru
      _
    %p44 = scmp.eq.s32.totalorder 0, 0
    // Predicated region
    $region18: #{tpu_custom_call.1} parent=1 // pred_check
      %p45 = pneg %p44
    $region19: #{tpu_custom_call.1} parent=1 // pred_check_branch
      %47 = sbr.rel (%p45) target = $region21
    $region20: #{tpu_custom_call.1} parent=1 // pred_region
      %48 = vst [vmem:[#allocation2] sm:$0xff] 0.0
    $region21: #{tpu_custom_call.1} parent=1 // pred_fallthru
      _
    %v49 = vld [vmem:[#allocation6] sm:$0xff]
    %v50 = vld [vmem:[#allocation6 + $0x8] sm:$0xff]
    %v51 = vld [vmem:[#allocation6 + $0x10] sm:$0xff]
    %v52 = vld [vmem:[#allocation6 + $0x18] sm:$0xff]
    %v53 = vld [vmem:[#allocation6 + $0x20] sm:$0xff]
    %v54 = vld [vmem:[#allocation6 + $0x28] sm:$0xff]
    %v55 = vld [vmem:[#allocation6 + $0x30] sm:$0xff]
    %v56 = vld [vmem:[#allocation6 + $0x38] sm:$0xff]
    %v57 = vld [vmem:[#allocation6 + $0x40] sm:$0xff]
    %v58 = vld [vmem:[#allocation6 + $0x48] sm:$0xff]
    %v59 = vld [vmem:[#allocation6 + $0x50] sm:$0xff]
    %v60 = vld [vmem:[#allocation6 + $0x58] sm:$0xff]
    %v61 = vld [vmem:[#allocation6 + $0x60] sm:$0xff]
    %v62 = vld [vmem:[#allocation6 + $0x68] sm:$0xff]
    %v63 = vld [vmem:[#allocation6 + $0x70] sm:$0xff]
    %v64 = vld [vmem:[#allocation6 + $0x78] sm:$0xff]
    %v65 = vld [vmem:[#allocation2] sm:$0xff]
    %v66 = vld [vmem:[#allocation3] sm:$0xff]
    %67 = vmatpush.msra.mxu0 %v64
    %68 = vmatpush.msra.mxu0 %v63
    %69 = vmatpush.msra.mxu0 %v62
    %70 = vmatpush.msra.mxu0 %v61
    %71 = vmatpush.msra.mxu0 %v60
    %72 = vmatpush.msra.mxu0 %v59
    %73 = vmatpush.msra.mxu0 %v58
    %74 = vmatpush.msra.mxu0 %v57
    %75 = vmatpush.msra.mxu0 %v56
    %76 = vmatpush.msra.mxu0 %v55
    %77 = vmatpush.msra.mxu0 %v54
    %78 = vmatpush.msra.mxu0 %v53
    %79 = vmatpush.msra.mxu0 %v52
    %80 = vmatpush.msra.mxu0 %v51
    %81 = vmatpush.msra.mxu0 %v50
    %82 = vmatpush.msra.mxu0 %v49
    %83 = vmatmul.f32.gmra.mxu0 %v65
    %v84 = vpop.f32.mrf.mxu0
    %v85 = vadd.f32 0.0, %v84
    %86 = vdwg.mxu0
    %v87 = vadd.f32 %v66, %v85
    %v88 = vtanh.pop %v87
    %89 = vst [vmem:[#allocation8] sm:$0xff] %v88
    %s90 = scalar_lea.vmem [#allocation3], 8
    %v91 = vld [vmem:[%s90] sm:$0xff]
    %92 = vmatpush.msra.mxu0 %v64
    %93 = vmatpush.msra.mxu0 %v63
    %94 = vmatpush.msra.mxu0 %v62
    %95 = vmatpush.msra.mxu0 %v61
    %96 = vmatpush.msra.mxu0 %v60
    %97 = vmatpush.msra.mxu0 %v59
    %98 = vmatpush.msra.mxu0 %v58
    %99 = vmatpush.msra.mxu0 %v57
    %100 = vmatpush.msra.mxu0 %v56
    %101 = vmatpush.msra.mxu0 %v55
    %102 = vmatpush.msra.mxu0 %v54
    %103 = vmatpush.msra.mxu0 %v53
    %104 = vmatpush.msra.mxu0 %v52
    %105 = vmatpush.msra.mxu0 %v51
    %106 = vmatpush.msra.mxu0 %v50
    %107 = vmatpush.msra.mxu0 %v49
    %108 = vmatmul.f32.gmra.mxu0 %v88
    %v109 = vpop.f32.mrf.mxu0
    %v110 = vadd.f32 0.0, %v109
    %111 = vdwg.mxu0
    %v112 = vadd.f32 %v91, %v110
    %v113 = vtanh.pop %v112
    %s114 = scalar_lea.vmem [#allocation8], 8
    %115 = vst [vmem:[%s114] sm:$0xff] %v113
    %s116 = scalar_lea.vmem [#allocation3], 16
    %v117 = vld [vmem:[%s116] sm:$0xff]
    %118 = vmatpush.msra.mxu0 %v64
    %119 = vmatpush.msra.mxu0 %v63
    %120 = vmatpush.msra.mxu0 %v62
    %121 = vmatpush.msra.mxu0 %v61
    %122 = vmatpush.msra.mxu0 %v60
    %123 = vmatpush.msra.mxu0 %v59
    %124 = vmatpush.msra.mxu0 %v58
    %125 = vmatpush.msra.mxu0 %v57
    %126 = vmatpush.msra.mxu0 %v56
    %127 = vmatpush.msra.mxu0 %v55
    %128 = vmatpush.msra.mxu0 %v54
    %129 = vmatpush.msra.mxu0 %v53
    %130 = vmatpush.msra.mxu0 %v52
    %131 = vmatpush.msra.mxu0 %v51
    %132 = vmatpush.msra.mxu0 %v50
    %133 = vmatpush.msra.mxu0 %v49
    %134 = vmatmul.f32.gmra.mxu0 %v113
    %v135 = vpop.f32.mrf.mxu0
    %v136 = vadd.f32 0.0, %v135
    %137 = vdwg.mxu0
    %v138 = vadd.f32 %v117, %v136
    %v139 = vtanh.pop %v138
    %s140 = scalar_lea.vmem [#allocation8], 16
    %141 = vst [vmem:[%s140] sm:$0xff] %v139
    %s142 = scalar_lea.vmem [#allocation3], 24
    %v143 = vld [vmem:[%s142] sm:$0xff]
    %144 = vmatpush.msra.mxu0 %v64
    %145 = vmatpush.msra.mxu0 %v63
    %146 = vmatpush.msra.mxu0 %v62
    %147 = vmatpush.msra.mxu0 %v61
    %148 = vmatpush.msra.mxu0 %v60
    %149 = vmatpush.msra.mxu0 %v59
    %150 = vmatpush.msra.mxu0 %v58
    %151 = vmatpush.msra.mxu0 %v57
    %152 = vmatpush.msra.mxu0 %v56
    %153 = vmatpush.msra.mxu0 %v55
    %154 = vmatpush.msra.mxu0 %v54
    %155 = vmatpush.msra.mxu0 %v53
    %156 = vmatpush.msra.mxu0 %v52
    %157 = vmatpush.msra.mxu0 %v51
    %158 = vmatpush.msra.mxu0 %v50
    %159 = vmatpush.msra.mxu0 %v49
    %160 = vmatmul.f32.gmra.mxu0 %v139
    %v161 = vpop.f32.mrf.mxu0
    %v162 = vadd.f32 0.0, %v161
    %163 = vdwg.mxu0
    %v164 = vadd.f32 %v143, %v162
    %v165 = vtanh.pop %v164
    %s166 = scalar_lea.vmem [#allocation8], 24
    %167 = vst [vmem:[%s166] sm:$0xff] %v165
    %s168 = scalar_lea.vmem [#allocation3], 32
    %v169 = vld [vmem:[%s168] sm:$0xff]
    %170 = vmatpush.msra.mxu0 %v64
    %171 = vmatpush.msra.mxu0 %v63
    %172 = vmatpush.msra.mxu0 %v62
    %173 = vmatpush.msra.mxu0 %v61
    %174 = vmatpush.msra.mxu0 %v60
    %175 = vmatpush.msra.mxu0 %v59
    %176 = vmatpush.msra.mxu0 %v58
    %177 = vmatpush.msra.mxu0 %v57
    %178 = vmatpush.msra.mxu0 %v56
    %179 = vmatpush.msra.mxu0 %v55
    %180 = vmatpush.msra.mxu0 %v54
    %181 = vmatpush.msra.mxu0 %v53
    %182 = vmatpush.msra.mxu0 %v52
    %183 = vmatpush.msra.mxu0 %v51
    %184 = vmatpush.msra.mxu0 %v50
    %185 = vmatpush.msra.mxu0 %v49
    %186 = vmatmul.f32.gmra.mxu0 %v165
    %v187 = vpop.f32.mrf.mxu0
    %v188 = vadd.f32 0.0, %v187
    %189 = vdwg.mxu0
    %v190 = vadd.f32 %v169, %v188
    %v191 = vtanh.pop %v190
    %s192 = scalar_lea.vmem [#allocation8], 32
    %193 = vst [vmem:[%s192] sm:$0xff] %v191
    %s194 = scalar_lea.vmem [#allocation3], 40
    %v195 = vld [vmem:[%s194] sm:$0xff]
    %196 = vmatpush.msra.mxu0 %v64
    %197 = vmatpush.msra.mxu0 %v63
    %198 = vmatpush.msra.mxu0 %v62
    %199 = vmatpush.msra.mxu0 %v61
    %200 = vmatpush.msra.mxu0 %v60
    %201 = vmatpush.msra.mxu0 %v59
    %202 = vmatpush.msra.mxu0 %v58
    %203 = vmatpush.msra.mxu0 %v57
    %204 = vmatpush.msra.mxu0 %v56
    %205 = vmatpush.msra.mxu0 %v55
    %206 = vmatpush.msra.mxu0 %v54
    %207 = vmatpush.msra.mxu0 %v53
    %208 = vmatpush.msra.mxu0 %v52
    %209 = vmatpush.msra.mxu0 %v51
    %210 = vmatpush.msra.mxu0 %v50
    %211 = vmatpush.msra.mxu0 %v49
    %212 = vmatmul.f32.gmra.mxu0 %v191
    %v213 = vpop.f32.mrf.mxu0
    %v214 = vadd.f32 0.0, %v213
    %215 = vdwg.mxu0
    %v216 = vadd.f32 %v195, %v214
    %v217 = vtanh.pop %v216
    %s218 = scalar_lea.vmem [#allocation8], 40
    %219 = vst [vmem:[%s218] sm:$0xff] %v217
    %s220 = scalar_lea.vmem [#allocation3], 48
    %v221 = vld [vmem:[%s220] sm:$0xff]
    %222 = vmatpush.msra.mxu0 %v64
    %223 = vmatpush.msra.mxu0 %v63
    %224 = vmatpush.msra.mxu0 %v62
    %225 = vmatpush.msra.mxu0 %v61
    %226 = vmatpush.msra.mxu0 %v60
    %227 = vmatpush.msra.mxu0 %v59
    %228 = vmatpush.msra.mxu0 %v58
    %229 = vmatpush.msra.mxu0 %v57
    %230 = vmatpush.msra.mxu0 %v56
    %231 = vmatpush.msra.mxu0 %v55
    %232 = vmatpush.msra.mxu0 %v54
    %233 = vmatpush.msra.mxu0 %v53
    %234 = vmatpush.msra.mxu0 %v52
    %235 = vmatpush.msra.mxu0 %v51
    %236 = vmatpush.msra.mxu0 %v50
    %237 = vmatpush.msra.mxu0 %v49
    %238 = vmatmul.f32.gmra.mxu0 %v217
    %v239 = vpop.f32.mrf.mxu0
    %v240 = vadd.f32 0.0, %v239
    %241 = vdwg.mxu0
    %v242 = vadd.f32 %v221, %v240
    %v243 = vtanh.pop %v242
    %s244 = scalar_lea.vmem [#allocation8], 48
    %245 = vst [vmem:[%s244] sm:$0xff] %v243
    %s246 = scalar_lea.vmem [#allocation3], 56
    %v247 = vld [vmem:[%s246] sm:$0xff]
    %248 = vmatpush.msra.mxu0 %v64
    %249 = vmatpush.msra.mxu0 %v63
    %250 = vmatpush.msra.mxu0 %v62
    %251 = vmatpush.msra.mxu0 %v61
    %252 = vmatpush.msra.mxu0 %v60
    %253 = vmatpush.msra.mxu0 %v59
    %254 = vmatpush.msra.mxu0 %v58
    %255 = vmatpush.msra.mxu0 %v57
    %256 = vmatpush.msra.mxu0 %v56
    %257 = vmatpush.msra.mxu0 %v55
    %258 = vmatpush.msra.mxu0 %v54
    %259 = vmatpush.msra.mxu0 %v53
    %260 = vmatpush.msra.mxu0 %v52
    %261 = vmatpush.msra.mxu0 %v51
    %262 = vmatpush.msra.mxu0 %v50
    %263 = vmatpush.msra.mxu0 %v49
    %264 = vmatmul.f32.gmra.mxu0 %v243
    %v265 = vpop.f32.mrf.mxu0
    %v266 = vadd.f32 0.0, %v265
    %267 = vdwg.mxu0
    %v268 = vadd.f32 %v247, %v266
    %v269 = vtanh.pop %v268
    %s270 = scalar_lea.vmem [#allocation8], 56
    %271 = vst [vmem:[%s270] sm:$0xff] %v269
    %272 = vst [vmem:[#allocation2] sm:$0xff] %v269
    // Predicated region
    $region22: #{tpu_custom_call.1} parent=1 // pred_check
      _
    $region23: #{tpu_custom_call.1} parent=1 // pred_check_branch
      %274 = sbr.rel (0) target = $region25
    $region24: #{tpu_custom_call.1} parent=1 // pred_region
      %276 = vsyncadd [#allocation5], 0
      %s277 = sshll.u32 [#allocation8], 4
      %s278 = int_to_ptr.vmem [resolvable:$true] %s277
      %s279 = sshll.u32 %s2, 4
      %s280 = int_to_ptr.hbm [resolvable:$true] %s279
      %285 = dma.vmem_to_hbm [thread:$0]  %s278, 1024, %s280, [#allocation5], 128, 128, 8
    $region25: #{tpu_custom_call.1} parent=1 // pred_fallthru
      _
    // Predicated region
    $region26: #{tpu_custom_call.1} parent=1 // pred_check
      _
    $region27: #{tpu_custom_call.1} parent=1 // pred_check_branch
      %287 = sbr.rel (0) target = $region29
    $region28: #{tpu_custom_call.1} parent=1 // pred_region
      %289 = dma.done [#allocation5], 1024
    $region29: #{tpu_custom_call.1} parent=1 // pred_fallthru
      _
    %290 = vsyncpa [#allocation4], 1
    %291 = vsyncpa [#allocation7], 1
    %292 = vsyncpa [#allocation5], 1

</llo_original>
